<compile_context>
chip_gen: v7x
topology: tpu7x:2x2x1
jax: 0.10.0
libtpu: 0.0.40
codegen_flags: <defaults>
</compile_context>

<pallas_src>
import jax
import jax.numpy as jnp
from jax.experimental import pallas as pl
from jax.experimental.pallas import tpu as pltpu

_NEG_SLOPE = 0.01          # F.leaky_relu default
_LANE = 128                # vreg lane width
_SUBLANE_BF16 = 16         # bf16 sublane packing
_TM_TARGET = 256           # 256-multiple M tiles feed the 2x256x256 MXU (v6e/v7x)


def _round_up(x, m):
    return ((x + m - 1) // m) * m


def _vmem_cap_bytes():
    """~75% of the chip's physical VMEM (headroom for double-buffering)."""
    try:
        return int(pltpu.get_tpu_info().vmem_capacity_bytes) * 3 // 4
    except Exception:
        return 48 * 1024 * 1024  # conservative (v7x-safe) fallback


def pad_weights(params, compute_dtype=jnp.bfloat16):
    """One-time prep (call OUTSIDE the per-step forward): zero-pad each
    (in_features, out_features) weight to 128-lane multiples and cast to the
    MXU compute dtype. Padding is numerically inert (zeros; leaky_relu(0)=0)."""
    padded = []
    for w in params:
        din, dout = w.shape
        dpi, dpo = _round_up(din, _LANE), _round_up(dout, _LANE)
        wp = jnp.zeros((dpi, dpo), compute_dtype).at[:din, :dout].set(
            w.astype(compute_dtype))
        padded.append(wp)
    return padded


def _make_kernel(num_layers, dims_p, compute_dtype):
    """kernel(x_ref, w0..wL-1, o_ref, scratch_a, scratch_b)."""

    def kernel(*refs):
        x_ref = refs[0]
        w_refs = refs[1:1 + num_layers]
        o_ref = refs[1 + num_layers]
        scratch = refs[2 + num_layers:]

        # Layer input starts from the streamed x block (cast once to bf16).
        h = x_ref[...].astype(compute_dtype)
        for i in range(num_layers):
            # bf16 x bf16 -> f32 accumulation on the MXU.
            y = jnp.dot(h, w_refs[i][...], preferred_element_type=jnp.float32)
            act = jnp.where(y >= 0, y, jnp.float32(_NEG_SLOPE) * y)  # f32 epilogue
            if i == num_layers - 1:
                o_ref[...] = act.astype(o_ref.dtype)
            else:
                # Explicit VMEM ping-pong scratch for the inter-layer activation.
                dst = scratch[i % 2]
                dst[:, 0:dims_p[i + 1]] = act.astype(compute_dtype)
                h = dst[:, 0:dims_p[i + 1]]

    return kernel


def fused_mlp(x, padded_params, *, compute_dtype=jnp.bfloat16,
              tm_target=_TM_TARGET, interpret=False):
    """Fused forward pass.

    x: (B, d0) activations (f32).
    padded_params: output of pad_weights() — lane-dense bf16 (in_p, out_p).
    Returns the PADDED (Bp, d_out_p) slab; slice [:B, :d_out] lazily downstream.
    """
    num_layers = len(padded_params)
    B, d0 = x.shape
    dims_p = [padded_params[0].shape[0]] + [w.shape[1] for w in padded_params]
    assert d0 <= dims_p[0]

    # Batch tiling (bf16 sublane packing -> multiples of 16).
    Bp = _round_up(max(B, _SUBLANE_BF16), _SUBLANE_BF16)
    tm = min(tm_target, Bp)
    Bp = _round_up(Bp, tm)
    grid = (Bp // tm,)

    # Per-call activation pad (weights were pre-padded once).
    x_p = jnp.zeros((Bp, dims_p[0]), x.dtype).at[:B, :d0].set(x)

    # Explicit VMEM budget: double-buffered x/out blocks + resident weights +
    # ping-pong scratch, with headroom.
    x_isz = jnp.dtype(x.dtype).itemsize
    w_isz = jnp.dtype(compute_dtype).itemsize
    hid_p = dims_p[1:-1]
    max_hid = max(hid_p) if hid_p else _LANE
    resident = 2 * tm * dims_p[0] * x_isz                      # x blocks
    resident += 2 * tm * dims_p[-1] * x_isz                    # out blocks
    resident += sum(2 * int(w.size) * w_isz for w in padded_params)
    resident += 2 * tm * max_hid * w_isz                       # scratch
    vmem_limit = int(min(_vmem_cap_bytes(),
                         max(32 * 1024 * 1024, 2 * resident + (1 << 20))))
    # TODO(synk): if `resident` exceeds the VMEM budget (very wide layers),
    # switch to a per-layer K/N-streamed weight pipeline (pltpu.emit_pipeline)
    # instead of keeping every weight VMEM-resident.

    in_specs = [pl.BlockSpec((tm, dims_p[0]), lambda i: (i, 0))]
    for li in range(num_layers):
        in_specs.append(
            pl.BlockSpec((dims_p[li], dims_p[li + 1]), lambda i: (0, 0)))
    out_spec = pl.BlockSpec((tm, dims_p[-1]), lambda i: (i, 0))

    scratch_shapes = (
        [pltpu.VMEM((tm, max_hid), compute_dtype),
         pltpu.VMEM((tm, max_hid), compute_dtype)]
        if num_layers > 1 else [])

    kernel = _make_kernel(num_layers, dims_p, compute_dtype)

    out_p = pl.pallas_call(
        kernel,
        out_shape=jax.ShapeDtypeStruct((Bp, dims_p[-1]), x.dtype),
        grid=grid,
        in_specs=in_specs,
        out_specs=out_spec,
        scratch_shapes=scratch_shapes,
        compiler_params=pltpu.CompilerParams(
            dimension_semantics=("parallel",),
            vmem_limit_bytes=vmem_limit),
        interpret=interpret,
    )(x_p, *padded_params)

    return out_p  # padded slab; consumer slices lazily


mlp_forward = jax.jit(
    fused_mlp, static_argnames=("compute_dtype", "tm_target", "interpret"))


def init_mlp_params(key, dims, dtype=jnp.float32):
    """Weights for Linear(dims[i-1] -> dims[i], bias=False), stored transposed
    as (in_features, out_features) so each layer is a plain x @ W_t."""
    params = []
    for i in range(1, len(dims)):
        key, sub = jax.random.split(key)
        fan_in = dims[i - 1]
        bound = 1.0 / float(fan_in) ** 0.5  # nn.Linear default init range
        w = jax.random.uniform(
            sub, (dims[i], dims[i - 1]), dtype=dtype, minval=-bound, maxval=bound)
        params.append(w.T)  # (in, out)
    return params


def mlp_reference(x, params):
    """Reference matching the kernel numerics: bf16 MXU inputs, f32 accum."""
    h = x
    for w in params:
        y = jnp.dot(h.astype(jnp.bfloat16), w.astype(jnp.bfloat16),
                    preferred_element_type=jnp.float32)
        h = jnp.where(y >= 0, y, _NEG_SLOPE * y)
    return h


if __name__ == "__main__":
    key = jax.random.PRNGKey(0)
    dims = [16, 32, 64, 32]  # MLP: Linear(16->32), (32->64), (64->32), + leaky_relu
    batch = 8

    k_x, k_w = jax.random.split(key)
    x = jax.random.normal(k_x, (batch, dims[0]), dtype=jnp.float32)
    params = init_mlp_params(k_w, dims)     # f32 (in, out) weights
    padded_params = pad_weights(params)     # one-time prep: pad + cast to bf16

    out_p = mlp_forward(x, padded_params)
    out_p = jax.block_until_ready(out_p)
    out = out_p[:batch, :dims[-1]]          # lazy consumer-side slice

    ref = mlp_reference(x, params)
    assert out.shape == (batch, dims[-1])
    assert jnp.allclose(out, ref, atol=1e-3, rtol=1e-3), "mismatch vs reference"

    print("KERNEL_OK")
</pallas_src>

<mosaic_0001>
module attributes {stable_mosaic.version = 11 : i64} {
  func.func @kernel(%arg0: i32, %arg1: memref<16x128xf32, #tpu.memory_space<vmem>>, %arg2: memref<128x128xbf16, #tpu.memory_space<vmem>>, %arg3: memref<128x128xbf16, #tpu.memory_space<vmem>>, %arg4: memref<128x128xbf16, #tpu.memory_space<vmem>>, %arg5: memref<16x128xf32, #tpu.memory_space<vmem>>, %arg6: memref<16x128xbf16, #tpu.memory_space<vmem>>, %arg7: memref<16x128xbf16, #tpu.memory_space<vmem>>) attributes {dimension_semantics = [#tpu.dimension_semantics<parallel>], iteration_bounds = array<i64: 1>, scalar_prefetch = 0 : i64, scratch_operands = 2 : i64, tpu.core_type = #tpu.core_type<tc>, window_params = [{transform_indices = @transform_0, window_bounds = array<i64: 16, 128>}, {pipeline_mode = #tpu.pipeline_mode<synchronous>, transform_indices = @transform_1, window_bounds = array<i64: 128, 128>}, {pipeline_mode = #tpu.pipeline_mode<synchronous>, transform_indices = @transform_2, window_bounds = array<i64: 128, 128>}, {pipeline_mode = #tpu.pipeline_mode<synchronous>, transform_indices = @transform_3, window_bounds = array<i64: 128, 128>}, {transform_indices = @transform_4, window_bounds = array<i64: 16, 128>}]} {
    %c0 = arith.constant 0 : index
    %c0_0 = arith.constant 0 : index
    %0 = vector.load %arg1[%c0, %c0_0] : memref<16x128xf32, #tpu.memory_space<vmem>>, vector<16x128xf32>
    %1 = arith.truncf %0 : vector<16x128xf32> to vector<16x128xbf16>
    %c0_1 = arith.constant 0 : index
    %c0_2 = arith.constant 0 : index
    %2 = vector.load %arg2[%c0_1, %c0_2] : memref<128x128xbf16, #tpu.memory_space<vmem>>, vector<128x128xbf16>
    %cst = arith.constant dense<0.000000e+00> : vector<16x128xf32>
    %3 = tpu.matmul %1, %2, %cst {dimension_numbers = #tpu.dot_dimension_numbers<[1], [0], [0], [1], [0, 0, 1, 1], [], []>} : vector<16x128xbf16>, vector<128x128xbf16>, vector<16x128xf32> -> vector<16x128xf32>
    %cst_3 = arith.constant 0.000000e+00 : f32
    %4 = vector.broadcast %cst_3 : f32 to vector<16x128xf32>
    %5 = arith.cmpf oge, %3, %4 : vector<16x128xf32>
    %cst_4 = arith.constant 0.00999999977 : f32
    %6 = vector.broadcast %cst_4 : f32 to vector<16x128xf32>
    %7 = arith.mulf %6, %3 : vector<16x128xf32>
    %8 = arith.select %5, %3, %7 : vector<16x128xi1>, vector<16x128xf32>
    %9 = arith.truncf %8 : vector<16x128xf32> to vector<16x128xbf16>
    %c0_5 = arith.constant 0 : index
    %c0_6 = arith.constant 0 : index
    %10 = vector.load %arg6[%c0_5, %c0_6] : memref<16x128xbf16, #tpu.memory_space<vmem>>, vector<16x128xbf16>
    tpu.vector_store %arg6[%c0_5, %c0_6], %9 {strides = array<i32>} : memref<16x128xbf16, #tpu.memory_space<vmem>>, vector<16x128xbf16>,
    %c0_7 = arith.constant 0 : index
    %c0_8 = arith.constant 0 : index
    %11 = vector.load %arg6[%c0_7, %c0_8] : memref<16x128xbf16, #tpu.memory_space<vmem>>, vector<16x128xbf16>
    %c0_9 = arith.constant 0 : index
    %c0_10 = arith.constant 0 : index
    %12 = vector.load %arg3[%c0_9, %c0_10] : memref<128x128xbf16, #tpu.memory_space<vmem>>, vector<128x128xbf16>
    %cst_11 = arith.constant dense<0.000000e+00> : vector<16x128xf32>
    %13 = tpu.matmul %11, %12, %cst_11 {dimension_numbers = #tpu.dot_dimension_numbers<[1], [0], [0], [1], [0, 0, 1, 1], [], []>} : vector<16x128xbf16>, vector<128x128xbf16>, vector<16x128xf32> -> vector<16x128xf32>
    %cst_12 = arith.constant 0.000000e+00 : f32
    %14 = vector.broadcast %cst_12 : f32 to vector<16x128xf32>
    %15 = arith.cmpf oge, %13, %14 : vector<16x128xf32>
    %cst_13 = arith.constant 0.00999999977 : f32
    %16 = vector.broadcast %cst_13 : f32 to vector<16x128xf32>
    %17 = arith.mulf %16, %13 : vector<16x128xf32>
    %18 = arith.select %15, %13, %17 : vector<16x128xi1>, vector<16x128xf32>
    %19 = arith.truncf %18 : vector<16x128xf32> to vector<16x128xbf16>
    %c0_14 = arith.constant 0 : index
    %c0_15 = arith.constant 0 : index
    %20 = vector.load %arg7[%c0_14, %c0_15] : memref<16x128xbf16, #tpu.memory_space<vmem>>, vector<16x128xbf16>
    tpu.vector_store %arg7[%c0_14, %c0_15], %19 {strides = array<i32>} : memref<16x128xbf16, #tpu.memory_space<vmem>>, vector<16x128xbf16>,
    %c0_16 = arith.constant 0 : index
    %c0_17 = arith.constant 0 : index
    %21 = vector.load %arg7[%c0_16, %c0_17] : memref<16x128xbf16, #tpu.memory_space<vmem>>, vector<16x128xbf16>
    %c0_18 = arith.constant 0 : index
    %c0_19 = arith.constant 0 : index
    %22 = vector.load %arg4[%c0_18, %c0_19] : memref<128x128xbf16, #tpu.memory_space<vmem>>, vector<128x128xbf16>
    %cst_20 = arith.constant dense<0.000000e+00> : vector<16x128xf32>
    %23 = tpu.matmul %21, %22, %cst_20 {dimension_numbers = #tpu.dot_dimension_numbers<[1], [0], [0], [1], [0, 0, 1, 1], [], []>} : vector<16x128xbf16>, vector<128x128xbf16>, vector<16x128xf32> -> vector<16x128xf32>
    %cst_21 = arith.constant 0.000000e+00 : f32
    %24 = vector.broadcast %cst_21 : f32 to vector<16x128xf32>
    %25 = arith.cmpf oge, %23, %24 : vector<16x128xf32>
    %cst_22 = arith.constant 0.00999999977 : f32
    %26 = vector.broadcast %cst_22 : f32 to vector<16x128xf32>
    %27 = arith.mulf %26, %23 : vector<16x128xf32>
    %28 = arith.select %25, %23, %27 : vector<16x128xi1>, vector<16x128xf32>
    %c0_23 = arith.constant 0 : index
    %c0_24 = arith.constant 0 : index
    %29 = vector.load %arg5[%c0_23, %c0_24] : memref<16x128xf32, #tpu.memory_space<vmem>>, vector<16x128xf32>
    tpu.vector_store %arg5[%c0_23, %c0_24], %28 {strides = array<i32>} : memref<16x128xf32, #tpu.memory_space<vmem>>, vector<16x128xf32>,
    return
  }
  func.func @transform_0(%arg0: i32) -> (i32, i32) {
    %c0_i32 = arith.constant 0 : i32
    %c0_i32_0 = arith.constant 0 : i32
    return %arg0, %c0_i32 : i32, i32
  }
  func.func @transform_1(%arg0: i32) -> (i32, i32) {
    %c0_i32 = arith.constant 0 : i32
    %c0_i32_0 = arith.constant 0 : i32
    %c0_i32_1 = arith.constant 0 : i32
    return %c0_i32, %c0_i32_0 : i32, i32
  }
  func.func @transform_2(%arg0: i32) -> (i32, i32) {
    %c0_i32 = arith.constant 0 : i32
    %c0_i32_0 = arith.constant 0 : i32
    %c0_i32_1 = arith.constant 0 : i32
    return %c0_i32, %c0_i32_0 : i32, i32
  }
  func.func @transform_3(%arg0: i32) -> (i32, i32) {
    %c0_i32 = arith.constant 0 : i32
    %c0_i32_0 = arith.constant 0 : i32
    %c0_i32_1 = arith.constant 0 : i32
    return %c0_i32, %c0_i32_0 : i32, i32
  }
  func.func @transform_4(%arg0: i32) -> (i32, i32) {
    %c0_i32 = arith.constant 0 : i32
    %c0_i32_0 = arith.constant 0 : i32
    return %arg0, %c0_i32 : i32, i32
  }
}

</mosaic_0001>

<llo_original>
// kernel: fused_mlp.1
$region0: #{fused_mlp.1}
  #allocation0 [shape = 'u32[]', space=smem, size = 0x4, offset = 0x4, fixed_abs, tag = 'smem constant byte address 0x4 - core index']
  #allocation1 [shape = 'u32[144,128]{1,0:T(1,128)}', space=vmem, size = 0x12000, scoped, tag = 'internal scratch']
  #allocation2 [shape = 'bf16[16,128]{1,0:T(16,128)(2,1)}', space=vmem, size = 0x1000, scoped, tag = 'scratch operand']
  #allocation3 [shape = 'bf16[16,128]{1,0:T(16,128)(2,1)}', space=vmem, size = 0x1000, scoped, tag = 'scratch operand']
  %s0 = inlined_call_operand.vmem [shape: f32[16,128], index: 0, kind: input, shape index: {}]
  %s1 = inlined_call_operand.hbm [shape: bf16[128,128], index: 1, kind: input, shape index: {}]
  %s2 = inlined_call_operand.hbm [shape: bf16[128,128], index: 2, kind: input, shape index: {}]
  %s3 = inlined_call_operand.hbm [shape: bf16[128,128], index: 3, kind: input, shape index: {}]
  %s4 = inlined_call_operand.hbm [shape: f32[16,128], index: 4, kind: output, shape index: {}]
  %s5 = sld [smem:[#allocation0]]
  $region38: #{fused_mlp.1} parent=0
    _
  %s7 = ssub.s32 1, %s5
  %s8 = scalar_select 0, %s7, %s5
  $region1: #{fused_mlp.1} parent=0
    #allocation4 [shape = 'u8[32768]{0}', space=vmem, size = 0x8000, scoped, tag = 'input window, operand 1, single buffered']
    #allocation5 [shape = 's32[1]{0}', space=sflag, size = 0x4, scoped, tag = 'scoped memory for fused_mlp.1']
    #allocation6 [shape = 's32[1]{0}', space=sflag, size = 0x4, scoped, tag = 'scoped memory for fused_mlp.1']
    #allocation7 [shape = 'u8[32768]{0}', space=vmem, size = 0x8000, scoped, tag = 'input window, operand 2, single buffered']
    #allocation8 [shape = 's32[1]{0}', space=sflag, size = 0x4, scoped, tag = 'scoped memory for fused_mlp.1']
    #allocation9 [shape = 'u8[32768]{0}', space=vmem, size = 0x8000, scoped, tag = 'input window, operand 3, single buffered']
    #allocation10 [shape = 'u8[8192]{0}', space=vmem, size = 0x2000, scoped, tag = 'output window, operand 0, single buffered']
    %9 = vsyncpa [#allocation5], 0
    %10 = vsyncpa [#allocation8], 0
    %11 = vsyncpa [#allocation6], 0
    // Predicated region
    $region2: #{fused_mlp.1} parent=1 // pred_check
      _
    $region3: #{fused_mlp.1} parent=1 // pred_check_branch
      %13 = sbr.rel (0) target = $region5
    $region4: #{fused_mlp.1} parent=1 // pred_region
      _
    $region5: #{fused_mlp.1} parent=1 // pred_fallthru
      _
    // Predicated region
    $region6: #{fused_mlp.1} parent=1 // pred_check
      _
    $region7: #{fused_mlp.1} parent=1 // pred_check_branch
      %15 = sbr.rel (0) target = $region9
    $region8: #{fused_mlp.1} parent=1 // pred_region
      %s17 = ssub.s32 1024, 1024
      %18 = vsyncadd [#allocation5], %s17
      %s19 = sshll.u32 [#allocation4], 4
      %s20 = int_to_ptr.vmem [resolvable:$true] %s19
      %25 = dma.hbm_to_vmem [thread:$0]  %s1, 1024, %s20, [#allocation5], 64, 64, 4
    $region9: #{fused_mlp.1} parent=1 // pred_fallthru
      _
    // Predicated region
    $region10: #{fused_mlp.1} parent=1 // pred_check
      _
    $region11: #{fused_mlp.1} parent=1 // pred_check_branch
      %27 = sbr.rel (0) target = $region13
    $region12: #{fused_mlp.1} parent=1 // pred_region
      %s29 = ssub.s32 1024, 1024
      %30 = vsyncadd [#allocation8], %s29
      %s31 = sshll.u32 [#allocation7], 4
      %s32 = int_to_ptr.vmem [resolvable:$true] %s31
      %37 = dma.hbm_to_vmem [thread:$0]  %s2, 1024, %s32, [#allocation8], 64, 64, 4
    $region13: #{fused_mlp.1} parent=1 // pred_fallthru
      _
    // Predicated region
    $region14: #{fused_mlp.1} parent=1 // pred_check
      _
    $region15: #{fused_mlp.1} parent=1 // pred_check_branch
      %39 = sbr.rel (0) target = $region17
    $region16: #{fused_mlp.1} parent=1 // pred_region
      %s41 = ssub.s32 1024, 1024
      %42 = vsyncadd [#allocation8], %s41
      %s43 = sshll.u32 [#allocation9], 4
      %s44 = int_to_ptr.vmem [resolvable:$true] %s43
      %49 = dma.hbm_to_vmem [thread:$0]  %s3, 1024, %s44, [#allocation8], 64, 64, 4
    $region17: #{fused_mlp.1} parent=1 // pred_fallthru
      _
    // Predicated region
    $region18: #{fused_mlp.1} parent=1 // pred_check
      _
    $region19: #{fused_mlp.1} parent=1 // pred_check_branch
      %51 = sbr.rel (0) target = $region21
    $region20: #{fused_mlp.1} parent=1 // pred_region
      %52 = dma.done [#allocation5], 1024
    $region21: #{fused_mlp.1} parent=1 // pred_fallthru
      _
    // Predicated region
    $region22: #{fused_mlp.1} parent=1 // pred_check
      _
    $region23: #{fused_mlp.1} parent=1 // pred_check_branch
      %54 = sbr.rel (0) target = $region25
    $region24: #{fused_mlp.1} parent=1 // pred_region
      %55 = dma.done [#allocation8], 1024
    $region25: #{fused_mlp.1} parent=1 // pred_fallthru
      _
    // Predicated region
    $region26: #{fused_mlp.1} parent=1 // pred_check
      _
    $region27: #{fused_mlp.1} parent=1 // pred_check_branch
      %57 = sbr.rel (0) target = $region29
    $region28: #{fused_mlp.1} parent=1 // pred_region
      %58 = dma.done [#allocation8], 1024
    $region29: #{fused_mlp.1} parent=1 // pred_fallthru
      _
    %v60 = vld [vmem:[%s0] sm:$0xff]
    %v61 = vld [vmem:[%s0 + $0x8] sm:$0xff]
    %v62 = vpack.c.bf16 %v61, %v60
    %v63 = vld [vmem:[#allocation4] sm:$0xf]
    %v64 = vld [vmem:[#allocation4 + $0x4] sm:$0xf]
    %v65 = vld [vmem:[#allocation4 + $0x8] sm:$0xf]
    %v66 = vld [vmem:[#allocation4 + $0xc] sm:$0xf]
    %v67 = vld [vmem:[#allocation4 + $0x10] sm:$0xf]
    %v68 = vld [vmem:[#allocation4 + $0x14] sm:$0xf]
    %v69 = vld [vmem:[#allocation4 + $0x18] sm:$0xf]
    %v70 = vld [vmem:[#allocation4 + $0x1c] sm:$0xf]
    %v71 = vld [vmem:[#allocation4 + $0x20] sm:$0xf]
    %v72 = vld [vmem:[#allocation4 + $0x24] sm:$0xf]
    %v73 = vld [vmem:[#allocation4 + $0x28] sm:$0xf]
    %v74 = vld [vmem:[#allocation4 + $0x2c] sm:$0xf]
    %v75 = vld [vmem:[#allocation4 + $0x30] sm:$0xf]
    %v76 = vld [vmem:[#allocation4 + $0x34] sm:$0xf]
    %v77 = vld [vmem:[#allocation4 + $0x38] sm:$0xf]
    %v78 = vld [vmem:[#allocation4 + $0x3c] sm:$0xf]
    %v95 = vunpack.c.l.b16 %v63
    %v96 = vunpack.c.l.b16 %v64
    %v97 = vunpack.c.l.b16 %v65
    %v98 = vunpack.c.l.b16 %v66
    %v99 = vunpack.c.l.b16 %v67
    %v100 = vunpack.c.l.b16 %v68
    %v101 = vunpack.c.l.b16 %v69
    %v102 = vunpack.c.l.b16 %v70
    %v103 = vunpack.c.l.b16 %v71
    %v104 = vunpack.c.l.b16 %v72
    %v105 = vunpack.c.l.b16 %v73
    %v106 = vunpack.c.l.b16 %v74
    %v107 = vunpack.c.l.b16 %v75
    %v108 = vunpack.c.l.b16 %v76
    %v109 = vunpack.c.l.b16 %v77
    %v110 = vunpack.c.l.b16 %v78
    %v111 = vpack.c.b16 %v96, %v95
    %v112 = vpack.c.b16 %v98, %v97
    %v113 = vpack.c.b16 %v100, %v99
    %v114 = vpack.c.b16 %v102, %v101
    %v115 = vpack.c.b16 %v104, %v103
    %v116 = vpack.c.b16 %v106, %v105
    %v117 = vpack.c.b16 %v108, %v107
    %v118 = vpack.c.b16 %v110, %v109
    %127 = vmatprep.subr.bf16.mxu0 0
    %128 = vmatpush1.bf16.msra.mxu0 %v111
    %129 = vmatprep.subr.bf16.mxu0 0
    %130 = vmatpush1.bf16.msra.mxu0 %v112
    %131 = vmatprep.subr.bf16.mxu0 0
    %132 = vmatpush1.bf16.msra.mxu0 %v113
    %133 = vmatprep.subr.bf16.mxu0 0
    %134 = vmatpush1.bf16.msra.mxu0 %v114
    %135 = vmatprep.subr.bf16.mxu0 0
    %136 = vmatpush1.bf16.msra.mxu0 %v115
    %137 = vmatprep.subr.bf16.mxu0 0
    %138 = vmatpush1.bf16.msra.mxu0 %v116
    %139 = vmatprep.subr.bf16.mxu0 0
    %140 = vmatpush1.bf16.msra.mxu0 %v117
    %141 = vmatprep.subr.bf16.mxu0 0
    %142 = vmatpush1.bf16.msra.mxu0 %v118
    %143 = vmatprep.subr.bf16.mxu0 0
    %144 = vmatpush1.bf16.msra.mxu0 0
    %145 = vmatprep.subr.bf16.mxu0 0
    %146 = vmatpush1.bf16.msra.mxu0 0
    %147 = vmatprep.subr.bf16.mxu0 0
    %148 = vmatpush1.bf16.msra.mxu0 0
    %149 = vmatprep.subr.bf16.mxu0 0
    %150 = vmatpush1.bf16.msra.mxu0 0
    %151 = vmatprep.subr.bf16.mxu0 0
    %152 = vmatpush1.bf16.msra.mxu0 0
    %153 = vmatprep.subr.bf16.mxu0 0
    %154 = vmatpush1.bf16.msra.mxu0 0
    %155 = vmatprep.subr.bf16.mxu0 0
    %156 = vmatpush1.bf16.msra.mxu0 0
    %157 = vmatprep.subr.bf16.mxu0 0
    %158 = vmatpush1.bf16.msra.mxu0 0
    %159 = vmatprep.mubr.bf16.mxu0 0
    %160 = vmatmul.mubr.bf16.gmra.mrb[0].mxu0 %v62
    %v161 = vpop.f32.mrb[0].mxu0
    %v162 = vadd.f32 0.0, %v161
    %v163 = vpop.f32.mrb[0].mxu0
    %v164 = vpop.f32.mrb[0].mxu0
    %v165 = vadd.f32 0.0, %v164
    %v166 = vpop.f32.mrb[0].mxu0
    %167 = vdwg.mxu0
    %vm168 = vcmp.ge.f32.partialorder %v162, 0.0
    %vm169 = vcmp.ge.f32.partialorder %v165, 0.0
    %v170 = vmul.f32 %v162, 0.01
    %v171 = vmul.f32 %v165, 0.01
    %v172 = vsel %vm168, %v162, %v170
    %v173 = vsel %vm169, %v165, %v171
    %v174 = vpack.c.bf16 %v173, %v172
    %175 = vst [vmem:[#allocation2] sm:$0xff] %v174
    %v176 = vld [vmem:[#allocation2] sm:$0xff]
    %v177 = vld [vmem:[#allocation7] sm:$0xf]
    %v178 = vld [vmem:[#allocation7 + $0x4] sm:$0xf]
    %v179 = vld [vmem:[#allocation7 + $0x8] sm:$0xf]
    %v180 = vld [vmem:[#allocation7 + $0xc] sm:$0xf]
    %v181 = vld [vmem:[#allocation7 + $0x10] sm:$0xf]
    %v182 = vld [vmem:[#allocation7 + $0x14] sm:$0xf]
    %v183 = vld [vmem:[#allocation7 + $0x18] sm:$0xf]
    %v184 = vld [vmem:[#allocation7 + $0x1c] sm:$0xf]
    %v185 = vld [vmem:[#allocation7 + $0x20] sm:$0xf]
    %v186 = vld [vmem:[#allocation7 + $0x24] sm:$0xf]
    %v187 = vld [vmem:[#allocation7 + $0x28] sm:$0xf]
    %v188 = vld [vmem:[#allocation7 + $0x2c] sm:$0xf]
    %v189 = vld [vmem:[#allocation7 + $0x30] sm:$0xf]
    %v190 = vld [vmem:[#allocation7 + $0x34] sm:$0xf]
    %v191 = vld [vmem:[#allocation7 + $0x38] sm:$0xf]
    %v192 = vld [vmem:[#allocation7 + $0x3c] sm:$0xf]
    %v209 = vunpack.c.l.b16 %v177
    %v210 = vunpack.c.l.b16 %v178
    %v211 = vunpack.c.l.b16 %v179
    %v212 = vunpack.c.l.b16 %v180
    %v213 = vunpack.c.l.b16 %v181
    %v214 = vunpack.c.l.b16 %v182
    %v215 = vunpack.c.l.b16 %v183
    %v216 = vunpack.c.l.b16 %v184
    %v217 = vunpack.c.l.b16 %v185
    %v218 = vunpack.c.l.b16 %v186
    %v219 = vunpack.c.l.b16 %v187
    %v220 = vunpack.c.l.b16 %v188
    %v221 = vunpack.c.l.b16 %v189
    %v222 = vunpack.c.l.b16 %v190
    %v223 = vunpack.c.l.b16 %v191
    %v224 = vunpack.c.l.b16 %v192
    %v225 = vpack.c.b16 %v210, %v209
    %v226 = vpack.c.b16 %v212, %v211
    %v227 = vpack.c.b16 %v214, %v213
    %v228 = vpack.c.b16 %v216, %v215
    %v229 = vpack.c.b16 %v218, %v217
    %v230 = vpack.c.b16 %v220, %v219
    %v231 = vpack.c.b16 %v222, %v221
    %v232 = vpack.c.b16 %v224, %v223
    %241 = vmatprep.subr.bf16.mxu0 0
    %242 = vmatpush1.bf16.msra.mxu0 %v225
    %243 = vmatprep.subr.bf16.mxu0 0
    %244 = vmatpush1.bf16.msra.mxu0 %v226
    %245 = vmatprep.subr.bf16.mxu0 0
    %246 = vmatpush1.bf16.msra.mxu0 %v227
    %247 = vmatprep.subr.bf16.mxu0 0
    %248 = vmatpush1.bf16.msra.mxu0 %v228
    %249 = vmatprep.subr.bf16.mxu0 0
    %250 = vmatpush1.bf16.msra.mxu0 %v229
    %251 = vmatprep.subr.bf16.mxu0 0
    %252 = vmatpush1.bf16.msra.mxu0 %v230
    %253 = vmatprep.subr.bf16.mxu0 0
    %254 = vmatpush1.bf16.msra.mxu0 %v231
    %255 = vmatprep.subr.bf16.mxu0 0
    %256 = vmatpush1.bf16.msra.mxu0 %v232
    %257 = vmatprep.subr.bf16.mxu0 0
    %258 = vmatpush1.bf16.msra.mxu0 0
    %259 = vmatprep.subr.bf16.mxu0 0
    %260 = vmatpush1.bf16.msra.mxu0 0
    %261 = vmatprep.subr.bf16.mxu0 0
    %262 = vmatpush1.bf16.msra.mxu0 0
    %263 = vmatprep.subr.bf16.mxu0 0
    %264 = vmatpush1.bf16.msra.mxu0 0
    %265 = vmatprep.subr.bf16.mxu0 0
    %266 = vmatpush1.bf16.msra.mxu0 0
    %267 = vmatprep.subr.bf16.mxu0 0
    %268 = vmatpush1.bf16.msra.mxu0 0
    %269 = vmatprep.subr.bf16.mxu0 0
    %270 = vmatpush1.bf16.msra.mxu0 0
    %271 = vmatprep.subr.bf16.mxu0 0
    %272 = vmatpush1.bf16.msra.mxu0 0
    %273 = vmatprep.mubr.bf16.mxu0 0
    %274 = vmatmul.mubr.bf16.gmra.mrb[0].mxu0 %v176
    %v275 = vpop.f32.mrb[0].mxu0
    %v276 = vadd.f32 0.0, %v275
    %v277 = vpop.f32.mrb[0].mxu0
    %v278 = vpop.f32.mrb[0].mxu0
    %v279 = vadd.f32 0.0, %v278
    %v280 = vpop.f32.mrb[0].mxu0
    %281 = vdwg.mxu0
    %vm282 = vcmp.ge.f32.partialorder %v276, 0.0
    %vm283 = vcmp.ge.f32.partialorder %v279, 0.0
    %v284 = vmul.f32 %v276, 0.01
    %v285 = vmul.f32 %v279, 0.01
    %v286 = vsel %vm282, %v276, %v284
    %v287 = vsel %vm283, %v279, %v285
    %v288 = vpack.c.bf16 %v287, %v286
    %289 = vst [vmem:[#allocation3] sm:$0xff] %v288
    %v290 = vld [vmem:[#allocation3] sm:$0xff]
    %v291 = vld [vmem:[#allocation9] sm:$0xf]
    %v292 = vld [vmem:[#allocation9 + $0x4] sm:$0xf]
    %v293 = vld [vmem:[#allocation9 + $0x8] sm:$0xf]
    %v294 = vld [vmem:[#allocation9 + $0xc] sm:$0xf]
    %v295 = vld [vmem:[#allocation9 + $0x10] sm:$0xf]
    %v296 = vld [vmem:[#allocation9 + $0x14] sm:$0xf]
    %v297 = vld [vmem:[#allocation9 + $0x18] sm:$0xf]
    %v298 = vld [vmem:[#allocation9 + $0x1c] sm:$0xf]
    %v299 = vld [vmem:[#allocation9 + $0x20] sm:$0xf]
    %v300 = vld [vmem:[#allocation9 + $0x24] sm:$0xf]
    %v301 = vld [vmem:[#allocation9 + $0x28] sm:$0xf]
    %v302 = vld [vmem:[#allocation9 + $0x2c] sm:$0xf]
    %v303 = vld [vmem:[#allocation9 + $0x30] sm:$0xf]
    %v304 = vld [vmem:[#allocation9 + $0x34] sm:$0xf]
    %v305 = vld [vmem:[#allocation9 + $0x38] sm:$0xf]
    %v306 = vld [vmem:[#allocation9 + $0x3c] sm:$0xf]
    %v323 = vunpack.c.l.b16 %v291
    %v324 = vunpack.c.l.b16 %v292
    %v325 = vunpack.c.l.b16 %v293
    %v326 = vunpack.c.l.b16 %v294
    %v327 = vunpack.c.l.b16 %v295
    %v328 = vunpack.c.l.b16 %v296
    %v329 = vunpack.c.l.b16 %v297
    %v330 = vunpack.c.l.b16 %v298
    %v331 = vunpack.c.l.b16 %v299
    %v332 = vunpack.c.l.b16 %v300
    %v333 = vunpack.c.l.b16 %v301
    %v334 = vunpack.c.l.b16 %v302
    %v335 = vunpack.c.l.b16 %v303
    %v336 = vunpack.c.l.b16 %v304
    %v337 = vunpack.c.l.b16 %v305
    %v338 = vunpack.c.l.b16 %v306
    %v339 = vpack.c.b16 %v324, %v323
    %v340 = vpack.c.b16 %v326, %v325
    %v341 = vpack.c.b16 %v328, %v327
    %v342 = vpack.c.b16 %v330, %v329
    %v343 = vpack.c.b16 %v332, %v331
    %v344 = vpack.c.b16 %v334, %v333
    %v345 = vpack.c.b16 %v336, %v335
    %v346 = vpack.c.b16 %v338, %v337
    %355 = vmatprep.subr.bf16.mxu0 0
    %356 = vmatpush1.bf16.msra.mxu0 %v339
    %357 = vmatprep.subr.bf16.mxu0 0
    %358 = vmatpush1.bf16.msra.mxu0 %v340
    %359 = vmatprep.subr.bf16.mxu0 0
    %360 = vmatpush1.bf16.msra.mxu0 %v341
    %361 = vmatprep.subr.bf16.mxu0 0
    %362 = vmatpush1.bf16.msra.mxu0 %v342
    %363 = vmatprep.subr.bf16.mxu0 0
    %364 = vmatpush1.bf16.msra.mxu0 %v343
    %365 = vmatprep.subr.bf16.mxu0 0
    %366 = vmatpush1.bf16.msra.mxu0 %v344
    %367 = vmatprep.subr.bf16.mxu0 0
    %368 = vmatpush1.bf16.msra.mxu0 %v345
    %369 = vmatprep.subr.bf16.mxu0 0
    %370 = vmatpush1.bf16.msra.mxu0 %v346
    %371 = vmatprep.subr.bf16.mxu0 0
    %372 = vmatpush1.bf16.msra.mxu0 0
    %373 = vmatprep.subr.bf16.mxu0 0
    %374 = vmatpush1.bf16.msra.mxu0 0
    %375 = vmatprep.subr.bf16.mxu0 0
    %376 = vmatpush1.bf16.msra.mxu0 0
    %377 = vmatprep.subr.bf16.mxu0 0
    %378 = vmatpush1.bf16.msra.mxu0 0
    %379 = vmatprep.subr.bf16.mxu0 0
    %380 = vmatpush1.bf16.msra.mxu0 0
    %381 = vmatprep.subr.bf16.mxu0 0
    %382 = vmatpush1.bf16.msra.mxu0 0
    %383 = vmatprep.subr.bf16.mxu0 0
    %384 = vmatpush1.bf16.msra.mxu0 0
    %385 = vmatprep.subr.bf16.mxu0 0
    %386 = vmatpush1.bf16.msra.mxu0 0
    %387 = vmatprep.mubr.bf16.mxu0 0
    %388 = vmatmul.mubr.bf16.gmra.mrb[0].mxu0 %v290
    %v389 = vpop.f32.mrb[0].mxu0
    %v390 = vadd.f32 0.0, %v389
    %v391 = vpop.f32.mrb[0].mxu0
    %v392 = vpop.f32.mrb[0].mxu0
    %v393 = vadd.f32 0.0, %v392
    %v394 = vpop.f32.mrb[0].mxu0
    %395 = vdwg.mxu0
    %vm396 = vcmp.ge.f32.partialorder %v390, 0.0
    %vm397 = vcmp.ge.f32.partialorder %v393, 0.0
    %v398 = vmul.f32 %v390, 0.01
    %v399 = vmul.f32 %v393, 0.01
    %v400 = vsel %vm396, %v390, %v398
    %v401 = vsel %vm397, %v393, %v399
    %402 = vst [vmem:[#allocation10] sm:$0xff] %v400
    %403 = vst [vmem:[#allocation10 + $0x8] sm:$0xff] %v401
    // Predicated region
    $region30: #{fused_mlp.1} parent=1 // pred_check
      _
    $region31: #{fused_mlp.1} parent=1 // pred_check_branch
      %405 = sbr.rel (0) target = $region33
    $region32: #{fused_mlp.1} parent=1 // pred_region
      %s407 = ssub.s32 256, 256
      %408 = vsyncadd [#allocation6], %s407
      %s409 = sshll.u32 [#allocation10], 4
      %s410 = int_to_ptr.vmem [resolvable:$true] %s409
      %415 = dma.vmem_to_hbm [thread:$0]  %s410, 256, %s4, [#allocation6], 128, 128, 8
    $region33: #{fused_mlp.1} parent=1 // pred_fallthru
      _
    // Predicated region
    $region34: #{fused_mlp.1} parent=1 // pred_check
      _
    $region35: #{fused_mlp.1} parent=1 // pred_check_branch
      %417 = sbr.rel (0) target = $region37
    $region36: #{fused_mlp.1} parent=1 // pred_region
      %418 = dma.done [#allocation6], 256
    $region37: #{fused_mlp.1} parent=1 // pred_fallthru
      _
    %419 = vsyncpa [#allocation5], 1
    %420 = vsyncpa [#allocation8], 1
    %421 = vsyncpa [#allocation6], 1

</llo_original>
